<compile_context>
chip_gen: v5e
topology: v5e:2x2
jax: 0.10.0
libtpu: 0.0.40
codegen_flags: <defaults>
</compile_context>

<pallas_src>
import math

import jax
import jax.numpy as jnp
from jax import lax
from jax.experimental import pallas as pl
from jax.experimental.pallas import tpu as pltpu

_LANES = 128
_HALF_LOG_2PI = 0.5 * math.log(2.0 * math.pi)


def _cdiv(a: int, b: int) -> int:
    return -(-a // b)


def _round_up(x: int, m: int) -> int:
    return _cdiv(x, m) * m


def _sublane_multiple(dtype) -> int:
    # Native VMEM tiles: 32-bit -> (8,128), 16-bit -> (16,128), 8-bit -> (32,128).
    return {4: 8, 2: 16, 1: 32}.get(jnp.dtype(dtype).itemsize, 8)


def _dist_loss_kernel(preds_ref, truth_ref, out_ref):
    # preds_ref: (4, tb, 128), components [mu1, log_sigma1, mu2, log_sigma2]
    #            stacked along the leading (untiled) axis, batch on lanes.
    # truth_ref: (tb, 128); out_ref: (tb, 128) float32.
    mu1 = preds_ref[0].astype(jnp.float32)
    log_sigma1 = preds_ref[1].astype(jnp.float32)
    mu2 = preds_ref[2].astype(jnp.float32)
    log_sigma2 = preds_ref[3].astype(jnp.float32)
    y = truth_ref[...].astype(jnp.float32)

    s1 = jnp.exp(log_sigma1)
    s2 = jnp.exp(log_sigma2)
    var = s1 * s1 + s2 * s2                  # sigma1^2 + sigma2^2
    inv_sigma = lax.rsqrt(var)               # no divide on the critical path
    log_sigma = 0.5 * jnp.log(var)           # == log(sqrt(var))
    log_y = jnp.log(y)
    z = (mu1 + mu2 - log_y) * inv_sigma
    # loss = -log_likelihood, with the negation folded into the sum.
    out_ref[...] = _HALF_LOG_2PI + log_sigma + log_y + 0.5 * (z * z)


def _loss_math_xla(preds, truth_flat):
    """Fused XLA path for tiny batches (identical math to the kernel)."""
    p = preds.astype(jnp.float32)
    y = truth_flat.astype(jnp.float32)
    mu1, ls1, mu2, ls2 = (p[:, i] for i in range(4))
    s1 = jnp.exp(ls1)
    s2 = jnp.exp(ls2)
    var = s1 * s1 + s2 * s2
    inv_sigma = lax.rsqrt(var)
    log_sigma = 0.5 * jnp.log(var)
    log_y = jnp.log(y)
    z = (mu1 + mu2 - log_y) * inv_sigma
    return _HALF_LOG_2PI + log_sigma + log_y + 0.5 * (z * z)


def distribution_loss_v2(preds: jax.Array, truth: jax.Array,
                         *, min_pallas_batch: int = 1024,
                         block_rows: int = 512) -> jax.Array:
    """preds: (B, 4) = (mu1, log_sigma1, mu2, log_sigma2); truth: (B, 1) or (B,).

    Returns the (B,) float32 per-sample negative log-likelihood, matching
    Distribution_Loss_v2.forward.
    """
    B = preds.shape[0]
    assert preds.shape == (B, 4), preds.shape
    truth_flat = jnp.reshape(truth, (B,))

    if B < min_pallas_batch:
        # Pallas launch overhead dominates a handful of elementwise rows.
        return _loss_math_xla(preds, truth_flat)

    sub = max(_sublane_multiple(preds.dtype), _sublane_multiple(truth_flat.dtype))
    rows = _cdiv(B, _LANES)
    rows_p = _round_up(rows, sub)             # minimal padding: sublane tile only
    Bp = rows_p * _LANES

    # Block rows: multiple of the sublane tile; always split into >=2 grid
    # steps when possible so both v7x TensorCores get work.
    tb = _round_up(max(int(block_rows), sub), sub)
    if rows_p > sub:
        tb = min(tb, _round_up(_cdiv(rows_p, 2), sub))
    tb = min(tb, rows_p)
    grid = _cdiv(rows_p, tb)                  # ragged last block handled by Pallas

    # Layout plumbing only (no dtype cast): batch onto lanes, components onto
    # the leading untiled axis. allow_input_fusion lets XLA fuse these
    # producers into the pallas_call operands rather than writing them to HBM.
    preds_t = jnp.transpose(preds)                                    # (4, B)
    if Bp != B:
        preds_t = jnp.pad(preds_t, ((0, 0), (0, Bp - B)))             # var = 2
        truth_flat = jnp.pad(truth_flat, (0, Bp - B), constant_values=1)  # log(1)=0
    preds_t = preds_t.reshape(4, rows_p, _LANES)
    truth_p = truth_flat.reshape(rows_p, _LANES)

    out = pl.pallas_call(
        _dist_loss_kernel,
        out_shape=jax.ShapeDtypeStruct((rows_p, _LANES), jnp.float32),
        grid_spec=pl.GridSpec(
            grid=(grid,),
            in_specs=[
                pl.BlockSpec((4, tb, _LANES), lambda i: (0, i, 0)),
                pl.BlockSpec((tb, _LANES), lambda i: (i, 0)),
            ],
            out_specs=pl.BlockSpec((tb, _LANES), lambda i: (i, 0)),
        ),
        compiler_params=pltpu.CompilerParams(
            dimension_semantics=("parallel",),
            allow_input_fusion=[True, True],
        ),
    )(preds_t, truth_p)

    out = out.reshape(Bp)
    return out if Bp == B else out[:B]


def _reference(preds, truth):
    """Direct transcription of the PyTorch loop (vectorized)."""
    mu1, ls1, mu2, ls2 = (preds[:, i] for i in range(4))
    y = truth.reshape(-1)
    sigma = jnp.sqrt(jnp.exp(ls1) ** 2 + jnp.exp(ls2) ** 2)
    mu = mu1 + mu2
    ll = (-0.5 * jnp.log(2 * jnp.pi) - jnp.log(sigma) - jnp.log(y)
          - 0.5 * ((mu - jnp.log(y)) / sigma) ** 2)
    return -ll


if __name__ == "__main__":
    key = jax.random.PRNGKey(0)
    k1, k2, k3, k4 = jax.random.split(key, 4)

    # --- small batch (module-typical shape): fused XLA fallback path ---
    B_small = 8
    preds_s = jax.random.normal(k1, (B_small, 4), dtype=jnp.float32) * 0.5
    truth_s = jax.random.uniform(k2, (B_small, 1), dtype=jnp.float32,
                                 minval=0.5, maxval=2.0)   # must be > 0
    loss_s = jax.block_until_ready(distribution_loss_v2(preds_s, truth_s))
    ref_s = _reference(preds_s, truth_s)
    assert loss_s.shape == (B_small,)
    assert jnp.allclose(loss_s, ref_s, rtol=1e-5, atol=1e-5), (loss_s, ref_s)

    # --- larger batch: exercises the Pallas kernel with padding (B not a
    # multiple of 128) and a ragged last grid block (rows_p=24, tb=16, grid=2),
    # with the row axis split across two grid steps ("parallel"). ---
    B_big = 3000
    preds_b = jax.random.normal(k3, (B_big, 4), dtype=jnp.float32) * 0.5
    truth_b = jax.random.uniform(k4, (B_big, 1), dtype=jnp.float32,
                                 minval=0.5, maxval=2.0)
    loss_b = jax.block_until_ready(distribution_loss_v2(preds_b, truth_b))
    ref_b = _reference(preds_b, truth_b)
    assert loss_b.shape == (B_big,)
    assert jnp.allclose(loss_b, ref_b, rtol=1e-5, atol=1e-4), (loss_b, ref_b)

    print("KERNEL_OK")
</pallas_src>

<mosaic_0001>
module attributes {stable_mosaic.version = 11 : i64} {
  func.func @_dist_loss_kernel(%arg0: i32, %arg1: memref<4x16x128xf32, #tpu.memory_space<vmem>>, %arg2: memref<16x128xf32, #tpu.memory_space<vmem>>, %arg3: memref<16x128xf32, #tpu.memory_space<vmem>>) attributes {dimension_semantics = [#tpu.dimension_semantics<parallel>], iteration_bounds = array<i64: 2>, scalar_prefetch = 0 : i64, scratch_operands = 0 : i64, tpu.core_type = #tpu.core_type<tc>, window_params = [{transform_indices = @transform_0, window_bounds = array<i64: 4, 16, 128>}, {transform_indices = @transform_1, window_bounds = array<i64: 16, 128>}, {transform_indices = @transform_2, window_bounds = array<i64: 16, 128>}]} {
    %c0 = arith.constant 0 : index
    %c0_0 = arith.constant 0 : index
    %c0_1 = arith.constant 0 : index
    %0 = vector.load %arg1[%c0, %c0_0, %c0_1] : memref<4x16x128xf32, #tpu.memory_space<vmem>>, vector<1x16x128xf32>
    %1 = vector.shape_cast %0 : vector<1x16x128xf32> to vector<16x128xf32>
    %c1 = arith.constant 1 : index
    %c0_2 = arith.constant 0 : index
    %c0_3 = arith.constant 0 : index
    %2 = vector.load %arg1[%c1, %c0_2, %c0_3] : memref<4x16x128xf32, #tpu.memory_space<vmem>>, vector<1x16x128xf32>
    %3 = vector.shape_cast %2 : vector<1x16x128xf32> to vector<16x128xf32>
    %c2 = arith.constant 2 : index
    %c0_4 = arith.constant 0 : index
    %c0_5 = arith.constant 0 : index
    %4 = vector.load %arg1[%c2, %c0_4, %c0_5] : memref<4x16x128xf32, #tpu.memory_space<vmem>>, vector<1x16x128xf32>
    %5 = vector.shape_cast %4 : vector<1x16x128xf32> to vector<16x128xf32>
    %c3 = arith.constant 3 : index
    %c0_6 = arith.constant 0 : index
    %c0_7 = arith.constant 0 : index
    %6 = vector.load %arg1[%c3, %c0_6, %c0_7] : memref<4x16x128xf32, #tpu.memory_space<vmem>>, vector<1x16x128xf32>
    %7 = vector.shape_cast %6 : vector<1x16x128xf32> to vector<16x128xf32>
    %c0_8 = arith.constant 0 : index
    %c0_9 = arith.constant 0 : index
    %8 = vector.load %arg2[%c0_8, %c0_9] : memref<16x128xf32, #tpu.memory_space<vmem>>, vector<16x128xf32>
    %9 = math.exp %3 : vector<16x128xf32>
    %10 = math.exp %7 : vector<16x128xf32>
    %11 = arith.mulf %9, %9 : vector<16x128xf32>
    %12 = arith.mulf %10, %10 : vector<16x128xf32>
    %13 = arith.addf %11, %12 : vector<16x128xf32>
    %14 = math.rsqrt %13 : vector<16x128xf32>
    %15 = math.log %13 : vector<16x128xf32>
    %cst = arith.constant 5.000000e-01 : f32
    %16 = vector.broadcast %cst : f32 to vector<16x128xf32>
    %17 = arith.mulf %16, %15 : vector<16x128xf32>
    %18 = math.log %8 : vector<16x128xf32>
    %19 = arith.addf %1, %5 : vector<16x128xf32>
    %20 = arith.subf %19, %18 : vector<16x128xf32>
    %21 = arith.mulf %20, %14 : vector<16x128xf32>
    %cst_10 = arith.constant 0.918938517 : f32
    %22 = vector.broadcast %cst_10 : f32 to vector<16x128xf32>
    %23 = arith.addf %22, %17 : vector<16x128xf32>
    %24 = arith.addf %23, %18 : vector<16x128xf32>
    %25 = arith.mulf %21, %21 : vector<16x128xf32>
    %cst_11 = arith.constant 5.000000e-01 : f32
    %26 = vector.broadcast %cst_11 : f32 to vector<16x128xf32>
    %27 = arith.mulf %26, %25 : vector<16x128xf32>
    %28 = arith.addf %24, %27 : vector<16x128xf32>
    %c0_12 = arith.constant 0 : index
    %c0_13 = arith.constant 0 : index
    %29 = vector.load %arg3[%c0_12, %c0_13] : memref<16x128xf32, #tpu.memory_space<vmem>>, vector<16x128xf32>
    tpu.vector_store %arg3[%c0_12, %c0_13], %28 {strides = array<i32>} : memref<16x128xf32, #tpu.memory_space<vmem>>, vector<16x128xf32>,
    return
  }
  func.func @transform_0(%arg0: i32) -> (i32, i32, i32) {
    %c0_i32 = arith.constant 0 : i32
    %c0_i32_0 = arith.constant 0 : i32
    %c0_i32_1 = arith.constant 0 : i32
    return %c0_i32, %arg0, %c0_i32_0 : i32, i32, i32
  }
  func.func @transform_1(%arg0: i32) -> (i32, i32) {
    %c0_i32 = arith.constant 0 : i32
    %c0_i32_0 = arith.constant 0 : i32
    return %arg0, %c0_i32 : i32, i32
  }
  func.func @transform_2(%arg0: i32) -> (i32, i32) {
    %c0_i32 = arith.constant 0 : i32
    %c0_i32_0 = arith.constant 0 : i32
    return %arg0, %c0_i32 : i32, i32
  }
}

</mosaic_0001>

<llo_original>
// kernel: tpu_custom_call.1
$region0: #{tpu_custom_call.1}
  #allocation0 [shape = 'u32[]', space=smem, size = 0x4, offset = 0x4, fixed_abs, tag = 'smem constant byte address 0x4 - core index']
  #allocation1 [shape = 'u32[72,128]{1,0:T(1,128)}', space=vmem, size = 0x9000, scoped, tag = 'internal scratch']
  #allocation8 [shape = 's32[]', space=sflag, size = 0x4, offset = 0, fixed_abs, tag = 'sflag constant byte address 0x0 - dummy sync flag']
  %s0 = inlined_call_operand.hbm [shape: f32[4,24,128], index: 0, kind: input, shape index: {}]
  %s1 = inlined_call_operand.hbm [shape: f32[24,128], index: 1, kind: input, shape index: {}]
  %s2 = inlined_call_operand.hbm [shape: f32[24,128], index: 2, kind: output, shape index: {}]
  %s3 = sld [smem:[#allocation0]]
  $region49: #{tpu_custom_call.1} parent=0
    _
  %s5 = ssub.s32 1, %s3
  %s6 = scalar_select 0, %s5, %s3
  $region1: #{tpu_custom_call.1} parent=0
    #allocation2 [shape = 'u8[65536]{0}', space=vmem, size = 0x10000, scoped, tag = 'input window, operand 0']
    #allocation3 [shape = 's32[2]{0}', space=sflag, size = 0x8, scoped, tag = 'scoped memory for tpu_custom_call.1']
    #allocation4 [shape = 's32[2]{0}', space=sflag, size = 0x8, scoped, tag = 'scoped memory for tpu_custom_call.1']
    #allocation5 [shape = 'u8[16384]{0}', space=vmem, size = 0x4000, scoped, tag = 'input window, operand 1']
    #allocation6 [shape = 's32[2]{0}', space=sflag, size = 0x8, scoped, tag = 'scoped memory for tpu_custom_call.1']
    #allocation7 [shape = 'u8[16384]{0}', space=vmem, size = 0x4000, scoped, tag = 'output window, operand 0']
    %7 = vsyncpa [#allocation3], 0
    %s8 = scalar_lea.sflag [#allocation3], 1
    %9 = vsyncpa %s8, 0
    %10 = vsyncpa [#allocation6], 0
    %s11 = scalar_lea.sflag [#allocation6], 1
    %12 = vsyncpa %s11, 0
    %13 = vsyncpa [#allocation4], 0
    %s14 = scalar_lea.sflag [#allocation4], 1
    %15 = vsyncpa %s14, 0
    loop: start=0, step=1, limit=4
    $region2: #{tpu_custom_call.1} parent=1 // loop_pre_header
      _
    $region3: #{tpu_custom_call.1} parent=1 // loop_header
      %s17 = sphi 0, %s21
      %p18 = scmp.ge.s32.totalorder %s17, 4
      %s27 = sphi 0, %s29
      %s30 = sphi 0, %s27
      %s31 = sphi 0, %s30
      %s47 = sphi 0, %s31
      %s53 = sphi 0, %s55
      %s56 = sphi 0, %s53
      %s57 = sphi 0, %s56
      %s73 = sphi 0, %s57
      %s79 = sphi 0, %s81
      %s82 = sphi 0, %s79
      %s83 = sphi 0, %s82
      %s99 = sphi 0, %s83
    $region4: #{tpu_custom_call.1} parent=1 // loop_header_branch
      %20 = sbr.rel (%p18) target = $region8
    $region5: #{tpu_custom_call.1} parent=1 // loop_body
      %s22 = ssub.s32 %s17, 1
      %s23 = ssub.s32 %s17, 2
      %s24 = sadd.s32 %s17, 1
      %s25 = ssub.s32 %s17, %s24
      %p26 = scmp.eq.s32.totalorder %s25, 0
      %s28 = sadd.s32 %s27, 1
      %s29 = scalar_select %p26, %s27, %s28
      %p32 = pneg %p26
      %p33 = scmp.eq.s32.totalorder %s17, 1
      %p34 = por %p32, %p33
      %p35 = scmp.ne.s32.totalorder %s27, %s30
      %p36 = scmp.eq.s32.totalorder %s17, 0
      %p37 = por %p35, %p36
      %p38 = scmp.ne.s32.totalorder %s27, %s30
      %p39 = scmp.eq.s32.totalorder %s22, 1
      %p40 = por %p38, %p39
      %p41 = scmp.ne.s32.totalorder %s30, %s31
      %p42 = scmp.eq.s32.totalorder %s22, 0
      %p43 = por %p41, %p42
      %p44 = scmp.ne.s32.totalorder %s30, %s31
      %p45 = scmp.eq.s32.totalorder %s23, 1
      %p46 = por %p44, %p45
      %p48 = scmp.ne.s32.totalorder %s31, %s47
      %p49 = scmp.eq.s32.totalorder %s23, 0
      %p50 = por %p48, %p49
      %s51 = ssub.s32 %s17, %s24
      %p52 = scmp.eq.s32.totalorder %s51, 0
      %s54 = sadd.s32 %s53, 1
      %s55 = scalar_select %p52, %s53, %s54
      %p58 = pneg %p52
      %p59 = scmp.eq.s32.totalorder %s17, 1
      %p60 = por %p58, %p59
      %p61 = scmp.ne.s32.totalorder %s53, %s56
      %p62 = scmp.eq.s32.totalorder %s17, 0
      %p63 = por %p61, %p62
      %p64 = scmp.ne.s32.totalorder %s53, %s56
      %p65 = scmp.eq.s32.totalorder %s22, 1
      %p66 = por %p64, %p65
      %p67 = scmp.ne.s32.totalorder %s56, %s57
      %p68 = scmp.eq.s32.totalorder %s22, 0
      %p69 = por %p67, %p68
      %p70 = scmp.ne.s32.totalorder %s56, %s57
      %p71 = scmp.eq.s32.totalorder %s23, 1
      %p72 = por %p70, %p71
      %p74 = scmp.ne.s32.totalorder %s57, %s73
      %p75 = scmp.eq.s32.totalorder %s23, 0
      %p76 = por %p74, %p75
      %s77 = ssub.s32 %s17, %s24
      %p78 = scmp.eq.s32.totalorder %s77, 0
      %s80 = sadd.s32 %s79, 1
      %s81 = scalar_select %p78, %s79, %s80
      %p84 = pneg %p78
      %p85 = scmp.eq.s32.totalorder %s17, 1
      %p86 = por %p84, %p85
      %p87 = scmp.ne.s32.totalorder %s79, %s82
      %p88 = scmp.eq.s32.totalorder %s17, 0
      %p89 = por %p87, %p88
      %p90 = scmp.ne.s32.totalorder %s79, %s82
      %p91 = scmp.eq.s32.totalorder %s22, 1
      %p92 = por %p90, %p91
      %p93 = scmp.ne.s32.totalorder %s82, %s83
      %p94 = scmp.eq.s32.totalorder %s22, 0
      %p95 = por %p93, %p94
      %p96 = scmp.ne.s32.totalorder %s82, %s83
      %p97 = scmp.eq.s32.totalorder %s23, 1
      %p98 = por %p96, %p97
      %p100 = scmp.ne.s32.totalorder %s83, %s99
      %p101 = scmp.eq.s32.totalorder %s23, 0
      %p102 = por %p100, %p101
      %p103 = scmp.le.s32.totalorder 1, %s17
      %p104 = scmp.lt.s32.totalorder %s17, 3
      %p105 = pnand %p103, %p104
      %p106 = pneg %p105
      // Predicated region
      $region9: #{tpu_custom_call.1} parent=5 // pred_check
        _
      $region10: #{tpu_custom_call.1} parent=5 // pred_check_branch
        %108 = sbr.rel (%p105) target = $region12
      $region11: #{tpu_custom_call.1} parent=5 // pred_region
        %s109 = ssub.s32 %s17, 1
      $region12: #{tpu_custom_call.1} parent=5 // pred_fallthru
        _
      %p110 = scmp.lt.s32.totalorder %s17, 2
      // Predicated region
      $region13: #{tpu_custom_call.1} parent=5 // pred_check
        %p111 = pneg %p110
      $region14: #{tpu_custom_call.1} parent=5 // pred_check_branch
        %113 = sbr.rel (%p111) target = $region16
      $region15: #{tpu_custom_call.1} parent=5 // pred_region
        // Predicated region
        $region17: #{tpu_custom_call.1} parent=15 // pred_check
          %p114 = pneg %p37
        $region18: #{tpu_custom_call.1} parent=15 // pred_check_branch
          %116 = sbr.rel (%p114) target = $region20
        $region19: #{tpu_custom_call.1} parent=15 // pred_region
          #allocation9 [shape = 'u32[6]{0}', space=smem, size = 0x18, scoped, tag = 'DMA stride descriptor']
          %s117 = sand.u32 %s27, 1
          %s118 = scalar_lea.sflag [#allocation3], %s117
          %s119 = sand.u32 %s27, 1
          %s120 = smul.addr %s119, 64
          %s121 = scalar_lea.vmem [#allocation2], %s120
          %s122 = smul.u32 2, %s17
          %s123 = ssub.s32 3, %s122
          %p124 = scmp.lt.s32.totalorder %s123, 2
          %s125 = scalar_select %p124, %s123, 2
          %s126 = smul.u32 32, %s125
          %s127 = ssub.s32 64, %s126
          %s128 = sshll.u32 %s127, 4
          %129 = vsyncadd %s118, %s128
          %p130 = scmp.ne.s32.totalorder 0, %s126
          %s131 = smul.addr %s122, 8
          %s132 = scalar_lea.hbm %s0, %s131
          %s133 = smul.u32 8, %s125
          %s134 = smul.u32 %s133, 4
          %s136 = sshll.u32 1, 14
          %s137 = sxor.u32 4294967295, %s136
          %s139 = sld [smem:[#allocation0]]
          %s140 = sadd.s32 2, %s139
          %s142 = sshll.u32 7, 26
          %s143 = sxor.u32 4294967295, %s142
          %s144 = sand.u32 0, %s143
          %s145 = sshll.u32 %s140, 26
          %s146 = sor.u32 %s144, %s145
          %s147 = sshll.u32 %s132, 4
          %s148 = int_to_ptr.hbm [resolvable:$true] %s147
          %s149 = sshll.u32 %s121, 4
          %s150 = int_to_ptr.vmem [resolvable:$true] %s149
          %s151 = sshll.u32 %s134, 4
          %156 = sst [smem:[#allocation9]] 384
          %s157 = scalar_lea.smem [#allocation9], 1
          %158 = sst [smem:[%s157]] 256
          %s159 = scalar_lea.smem [#allocation9], 2
          %160 = sst [smem:[%s159]] %s125
          %s161 = scalar_lea.smem [#allocation9], 3
          %162 = sst [smem:[%s161]] 128
          %s163 = scalar_lea.smem [#allocation9], 4
          %164 = sst [smem:[%s163]] 128
          %s165 = scalar_lea.smem [#allocation9], 5
          %166 = sst [smem:[%s165]] 8
          %168 = dma.general (%p130), %s148, %s151, %s150, %s118, [#allocation8], [#allocation9], %s146, 0
        $region20: #{tpu_custom_call.1} parent=15 // pred_fallthru
          _
        // Predicated region
        $region21: #{tpu_custom_call.1} parent=15 // pred_check
          %p169 = pneg %p63
        $region22: #{tpu_custom_call.1} parent=15 // pred_check_branch
          %171 = sbr.rel (%p169) target = $region24
        $region23: #{tpu_custom_call.1} parent=15 // pred_region
          %s172 = sand.u32 %s53, 1
          %s173 = scalar_lea.sflag [#allocation6], %s172
          %s174 = sand.u32 %s53, 1
          %s175 = smul.addr %s174, 16
          %s176 = scalar_lea.vmem [#allocation5], %s175
          %s177 = smul.u32 2, %s17
          %s178 = ssub.s32 3, %s177
          %p179 = scmp.lt.s32.totalorder %s178, 2
          %s180 = scalar_select %p179, %s178, 2
          %s181 = smul.u32 8, %s180
          %s182 = ssub.s32 16, %s181
          %s183 = sshll.u32 %s182, 4
          %184 = vsyncadd %s173, %s183
          %p185 = scmp.ne.s32.totalorder 0, %s181
          %s186 = smul.addr %s177, 8
          %s187 = scalar_lea.hbm %s1, %s186
          %s188 = smul.u32 8, %s180
          %s189 = sshll.u32 %s187, 4
          %s190 = int_to_ptr.hbm [resolvable:$true] %s189
          %s191 = sshll.u32 %s176, 4
          %s192 = int_to_ptr.vmem [resolvable:$true] %s191
          %s193 = sshll.u32 %s188, 4
          %197 = dma.hbm_to_vmem [thread:$0]  (%p185), %s190, %s193, %s192, %s173, 128, 128, 8
        $region24: #{tpu_custom_call.1} parent=15 // pred_fallthru
          _
      $region16: #{tpu_custom_call.1} parent=5 // pred_fallthru
        _
      %p198 = scmp.le.s32.totalorder 1, %s17
      %p199 = scmp.lt.s32.totalorder %s17, 3
      %p200 = pnand %p198, %p199
      %p201 = pneg %p200
      // Predicated region
      $region25: #{tpu_custom_call.1} parent=5 // pred_check
        _
      $region26: #{tpu_custom_call.1} parent=5 // pred_check_branch
        %203 = sbr.rel (%p200) target = $region28
      $region27: #{tpu_custom_call.1} parent=5 // pred_region
        %s204 = ssub.s32 %s17, 1
        %s205 = sand.u32 %s30, 1
        %s206 = scalar_lea.sflag [#allocation3], %s205
        %s207 = sand.u32 %s30, 1
        %s208 = smul.addr %s207, 64
        %s209 = scalar_lea.vmem [#allocation2], %s208
        // Predicated region
        $region29: #{tpu_custom_call.1} parent=27 // pred_check
          %p210 = pneg %p43
        $region30: #{tpu_custom_call.1} parent=27 // pred_check_branch
          %212 = sbr.rel (%p210) target = $region32
        $region31: #{tpu_custom_call.1} parent=27 // pred_region
          %214 = dma.done %s206, 1024
        $region32: #{tpu_custom_call.1} parent=27 // pred_fallthru
          _
        %s215 = sand.u32 %s56, 1
        %s216 = scalar_lea.sflag [#allocation6], %s215
        %s217 = sand.u32 %s56, 1
        %s218 = smul.addr %s217, 16
        %s219 = scalar_lea.vmem [#allocation5], %s218
        // Predicated region
        $region33: #{tpu_custom_call.1} parent=27 // pred_check
          %p220 = pneg %p69
        $region34: #{tpu_custom_call.1} parent=27 // pred_check_branch
          %222 = sbr.rel (%p220) target = $region36
        $region35: #{tpu_custom_call.1} parent=27 // pred_region
          %224 = dma.done %s216, 256
        $region36: #{tpu_custom_call.1} parent=27 // pred_fallthru
          _
        %s225 = sand.u32 %s30, 1
        %s226 = scalar_lea.sflag [#allocation3], %s225
        %s227 = sand.u32 %s30, 1
        %s228 = smul.addr %s227, 64
        %s229 = scalar_lea.vmem [#allocation2], %s228
        %p230 = pneg %p43
        %p231 = pneg %p40
        %s232 = sand.u32 %s56, 1
        %s233 = scalar_lea.sflag [#allocation6], %s232
        %s234 = sand.u32 %s56, 1
        %s235 = smul.addr %s234, 16
        %s236 = scalar_lea.vmem [#allocation5], %s235
        %p237 = pneg %p69
        %p238 = pneg %p66
        %p239 = pneg %p95
        %p240 = pneg %p92
        %s241 = sand.u32 %s82, 1
        %s242 = scalar_lea.sflag [#allocation4], %s241
        %s243 = sand.u32 %s82, 1
        %s244 = smul.addr %s243, 16
        %s245 = scalar_lea.vmem [#allocation7], %s244
        %s246 = smul.u32 2, %s22
        %s247 = ssub.s32 3, %s246
        %p248 = scmp.lt.s32.totalorder %s247, 2
        %s249 = scalar_select %p248, %s247, 2
        %s250 = smul.u32 32, %s249
        %s251 = smul.u32 2, %s22
        %s252 = ssub.s32 3, %s251
        %p253 = scmp.lt.s32.totalorder %s252, 2
        %s254 = scalar_select %p253, %s252, 2
        %s255 = smul.u32 8, %s254
        %s256 = smul.u32 2, %s22
        %s257 = ssub.s32 3, %s256
        %p258 = scmp.lt.s32.totalorder %s257, 2
        %s259 = scalar_select %p258, %s257, 2
        %s260 = smul.u32 8, %s259
        %v261 = vld [vmem:[%s209] sm:$0xff]
        %v262 = vld [vmem:[%s209 + $0x8] sm:$0xff]
        %s263 = scalar_lea.vmem %s209, 16 [#allocation2]
        %v264 = vld [vmem:[%s263] sm:$0xff]
        %v265 = vld [vmem:[%s263 + $0x8] sm:$0xff]
        %s266 = scalar_lea.vmem %s209, 32 [#allocation2]
        %v267 = vld [vmem:[%s266] sm:$0xff]
        %v268 = vld [vmem:[%s266 + $0x8] sm:$0xff]
        %s269 = scalar_lea.vmem %s209, 48 [#allocation2]
        %v270 = vld [vmem:[%s269] sm:$0xff]
        %v271 = vld [vmem:[%s269 + $0x8] sm:$0xff]
        %v272 = vld [vmem:[%s219] sm:$0xff]
        %v273 = vld [vmem:[%s219 + $0x8] sm:$0xff]
        %v274 = vmul.f32 %v264, 1.442695
        %v275 = vpow.pop %v274
        %v276 = vmul.f32 %v265, 1.442695
        %v277 = vpow.pop %v276
        %v278 = vmul.f32 %v270, 1.442695
        %v279 = vpow.pop %v278
        %v280 = vmul.f32 %v271, 1.442695
        %v281 = vpow.pop %v280
        %v282 = vmul.f32 %v275, %v275
        %v283 = vmul.f32 %v277, %v277
        %v284 = vmul.f32 %v279, %v279
        %v285 = vmul.f32 %v281, %v281
        %v286 = vadd.f32 %v282, %v284
        %v287 = vadd.f32 %v283, %v285
        %v288 = vrsqrt.pop %v286
        %v289 = vmul.f32 %v288, %v286
        %v290 = vmul.f32 %v289, %v288
        %v291 = vmul.f32 0.5, %v290
        %v292 = vsub.f32 1.5, %v291
        %v293 = vmul.f32 %v288, %v292
        %vm294 = vweird.f32 %v286
        %vm295 = vweird.f32 %v288
        %vm296 = vmor %vm294, %vm295
        %v297 = vsel %vm296, %v288, %v293
        %v298 = vrsqrt.pop %v287
        %v299 = vmul.f32 %v298, %v287
        %v300 = vmul.f32 %v299, %v298
        %v301 = vmul.f32 0.5, %v300
        %v302 = vsub.f32 1.5, %v301
        %v303 = vmul.f32 %v298, %v302
        %vm304 = vweird.f32 %v287
        %vm305 = vweird.f32 %v298
        %vm306 = vmor %vm304, %vm305
        %v307 = vsel %vm306, %v298, %v303
        %v308 = vlog2.pop %v286
        %v309 = vmul.f32 %v308, 0.6931472
        %v310 = vlog2.pop %v287
        %v311 = vmul.f32 %v310, 0.6931472
        %v312 = vmul.f32 %v309, 0.5
        %v313 = vmul.f32 %v311, 0.5
        %v314 = vlog2.pop %v272
        %v315 = vmul.f32 %v314, 0.6931472
        %v316 = vlog2.pop %v273
        %v317 = vmul.f32 %v316, 0.6931472
        %v318 = vadd.f32 %v261, %v267
        %v319 = vadd.f32 %v262, %v268
        %v320 = vsub.f32 %v318, %v315
        %v321 = vsub.f32 %v319, %v317
        %v322 = vmul.f32 %v320, %v297
        %v323 = vmul.f32 %v321, %v307
        %v324 = vadd.f32 %v312, 0.9189385
        %v325 = vadd.f32 %v313, 0.9189385
        %v326 = vadd.f32 %v324, %v315
        %v327 = vadd.f32 %v325, %v317
        %v328 = vmul.f32 %v322, %v322
        %v329 = vmul.f32 %v323, %v323
        %v330 = vmul.f32 %v328, 0.5
        %v331 = vmul.f32 %v329, 0.5
        %v332 = vadd.f32 %v326, %v330
        %v333 = vadd.f32 %v327, %v331
        %334 = vst [vmem:[%s245] sm:$0xff] %v332
        %335 = vst [vmem:[%s245 + $0x8] sm:$0xff] %v333
        %s336 = sand.u32 %s82, 1
        %s337 = scalar_lea.sflag [#allocation4], %s336
        %s338 = sand.u32 %s82, 1
        %s339 = smul.addr %s338, 16
        %s340 = scalar_lea.vmem [#allocation7], %s339
        // Predicated region
        $region37: #{tpu_custom_call.1} parent=27 // pred_check
          %p341 = pneg %p92
        $region38: #{tpu_custom_call.1} parent=27 // pred_check_branch
          %343 = sbr.rel (%p341) target = $region40
        $region39: #{tpu_custom_call.1} parent=27 // pred_region
          %s344 = smul.u32 2, %s22
          %s345 = ssub.s32 3, %s344
          %p346 = scmp.lt.s32.totalorder %s345, 2
          %s347 = scalar_select %p346, %s345, 2
          %s348 = smul.u32 8, %s347
          %s349 = ssub.s32 16, %s348
          %s350 = sshll.u32 %s349, 4
          %351 = vsyncadd %s337, %s350
          %p352 = scmp.ne.s32.totalorder 0, %s348
          %s353 = smul.addr %s344, 8
          %s354 = scalar_lea.hbm %s2, %s353
          %s355 = smul.u32 8, %s347
          %s356 = sshll.u32 %s340, 4
          %s357 = int_to_ptr.vmem [resolvable:$true] %s356
          %s358 = sshll.u32 %s354, 4
          %s359 = int_to_ptr.hbm [resolvable:$true] %s358
          %s360 = sshll.u32 %s355, 4
          %364 = dma.vmem_to_hbm [thread:$0]  (%p352), %s357, %s360, %s359, %s337, 128, 128, 8
        $region40: #{tpu_custom_call.1} parent=27 // pred_fallthru
          _
      $region28: #{tpu_custom_call.1} parent=5 // pred_fallthru
        _
      %p365 = scmp.le.s32.totalorder 2, %s17
      // Predicated region
      $region41: #{tpu_custom_call.1} parent=5 // pred_check
        %p366 = pneg %p365
      $region42: #{tpu_custom_call.1} parent=5 // pred_check_branch
        %368 = sbr.rel (%p366) target = $region44
      $region43: #{tpu_custom_call.1} parent=5 // pred_region
        %s369 = ssub.s32 %s17, 2
        // Predicated region
        $region45: #{tpu_custom_call.1} parent=43 // pred_check
          %p370 = pneg %p98
        $region46: #{tpu_custom_call.1} parent=43 // pred_check_branch
          %372 = sbr.rel (%p370) target = $region48
        $region47: #{tpu_custom_call.1} parent=43 // pred_region
          %s373 = sand.u32 %s83, 1
          %s374 = scalar_lea.sflag [#allocation4], %s373
          %s375 = sand.u32 %s83, 1
          %s376 = smul.addr %s375, 16
          %s377 = scalar_lea.vmem [#allocation7], %s376
          %379 = dma.done %s374, 256
        $region48: #{tpu_custom_call.1} parent=43 // pred_fallthru
          _
      $region44: #{tpu_custom_call.1} parent=5 // pred_fallthru
        _
    $region6: #{tpu_custom_call.1} parent=1 // loop_footer
      %s21 = sadd.s32 1, %s17
    $region7: #{tpu_custom_call.1} parent=1 // loop_footer_branch
      %16 = sbr.rel target = $region3
    $region8: #{tpu_custom_call.1} parent=1 // loop_exit
      _
    %380 = vsyncpa [#allocation3], 1
    %s381 = scalar_lea.sflag [#allocation3], 1
    %382 = vsyncpa %s381, 1
    %383 = vsyncpa [#allocation6], 1
    %s384 = scalar_lea.sflag [#allocation6], 1
    %385 = vsyncpa %s384, 1
    %386 = vsyncpa [#allocation4], 1
    %s387 = scalar_lea.sflag [#allocation4], 1
    %388 = vsyncpa %s387, 1

</llo_original>
